<compile_context>
chip_gen: v7x
topology: tpu7x:2x2x1
jax: 0.10.0
libtpu: 0.0.40
codegen_flags: <defaults>
</compile_context>

<pallas_src>
import jax
import jax.numpy as jnp
from jax.experimental import pallas as pl
from jax.experimental.pallas import tpu as pltpu

_LANE = 128      # lane (last-dim) granularity. NOTE: v6e/v7x MXU passes are
                 # 256 wide; choosing model dims as multiples of 256 uses the
                 # array fully, but padding zeros past 128 only adds DMA.
_SUBLANE = 8     # sublane (second-to-last dim) granularity


def _round_up(x, m):
    return ((x + m - 1) // m) * m


# ---------------------------------------------------------------------------
# Capability probe: does this JAX accept pipeline_mode=pl.Buffered(1) on a
# top-level pallas_call BlockSpec?  Must be called OUTSIDE jit.
# ---------------------------------------------------------------------------
_BUFFERED_SUPPORTED = None


def _probe_buffered_support():
    global _BUFFERED_SUPPORTED
    if _BUFFERED_SUPPORTED is not None:
        return _BUFFERED_SUPPORTED
    try:
        def k(x_ref, o_ref):
            o_ref[...] = x_ref[...]

        x = jnp.arange(8 * 128, dtype=jnp.float32).reshape(8, 128)
        probe = pl.pallas_call(
            k,
            out_shape=jax.ShapeDtypeStruct((8, 128), jnp.float32),
            grid=(2,),
            in_specs=[pl.BlockSpec((8, 128), lambda i: (0, 0),
                                   pipeline_mode=pl.Buffered(1))],
            out_specs=pl.BlockSpec((8, 128), lambda i: (0, 0)),
        )
        y = jax.block_until_ready(probe(x))
        _BUFFERED_SUPPORTED = bool(jnp.allclose(y, x))
    except Exception:
        _BUFFERED_SUPPORTED = False
    return _BUFFERED_SUPPORTED


def _vmem_budget_bytes():
    """~3/4 of this generation's per-core VMEM (headroom for compiler scratch)."""
    try:
        cap = int(pltpu.get_tpu_info().vmem_capacity_bytes)
    except Exception:
        return None
    return (cap * 3) // 4


# ---------------------------------------------------------------------------
# Kernel bodies
# ---------------------------------------------------------------------------
def _make_fused_mlp_kernel(relu_flags):
    """Auto-pipelined path: refs = (x, w0, b0, ..., w_{L-1}, b_{L-1}, out)."""
    n_layers = len(relu_flags)

    def kernel(*refs):
        x_ref = refs[0]
        o_ref = refs[1 + 2 * n_layers]
        h = x_ref[...]
        for li in range(n_layers):
            w = refs[1 + 2 * li][...]
            b = refs[2 + 2 * li][...]                       # (1, N) f32 bias
            y = jnp.dot(h.astype(w.dtype), w,
                        preferred_element_type=jnp.float32)  # MXU, f32 acc
            y = y + b                                        # f32 epilogue
            if relu_flags[li]:
                y = jnp.maximum(y, 0.0)                      # fused ReLU
            # keep inter-layer activations in the compute dtype (saves VMEM)
            h = y.astype(w.dtype) if li + 1 < n_layers else y
        o_ref[...] = h.astype(o_ref.dtype)

    return kernel


def _make_prefetch_mlp_kernel(relu_flags):
    """Single-grid-step path: weights live in HBM (pl.ANY) and are manually
    DMA'd into per-layer VMEM scratch, prefetching layer i+1 while computing
    layer i.  refs = (x, w0_hbm, b0, ..., out, wbuf_0.., sem)."""
    n = len(relu_flags)

    def kernel(*refs):
        x_ref = refs[0]
        w_hbm = [refs[1 + 2 * i] for i in range(n)]
        b_ref = [refs[2 + 2 * i] for i in range(n)]
        o_ref = refs[1 + 2 * n]
        w_buf = list(refs[2 + 2 * n: 2 + 3 * n])
        sem = refs[2 + 3 * n]

        def w_copy(i):
            return pltpu.make_async_copy(w_hbm[i], w_buf[i], sem.at[i])

        w_copy(0).start()
        h = x_ref[...]
        for li in range(n):
            if li + 1 < n:
                w_copy(li + 1).start()       # prefetch next layer's weights
            w_copy(li).wait()                # this layer's weights are in VMEM
            w = w_buf[li][...]
            y = jnp.dot(h.astype(w.dtype), w,
                        preferred_element_type=jnp.float32)
            y = y + b_ref[li][...]
            if relu_flags[li]:
                y = jnp.maximum(y, 0.0)
            h = y.astype(w.dtype) if li + 1 < n else y
        o_ref[...] = h.astype(o_ref.dtype)

    return kernel


# ---------------------------------------------------------------------------
# Parameter init (PyTorch layout) and one-time preparation (transpose + pad)
# ---------------------------------------------------------------------------
def init_mlp_params(key, in_dim, hid_dim, out_dim, layer_num=2,
                    dtype=jnp.float32):
    """Same structure as the PyTorch module:
       [Linear(in,hid)] + (layer_num-1)*[Linear(hid,hid), ReLU] + [Linear(hid,out)]
       Weights stored PyTorch-style (out_features, in_features)."""
    dims = [(in_dim, hid_dim)]
    for _ in range(layer_num - 1):
        dims.append((hid_dim, hid_dim))
    dims.append((hid_dim, out_dim))

    params = []
    for fan_in, fan_out in dims:
        key, wk, bk = jax.random.split(key, 3)
        bound = 1.0 / jnp.sqrt(fan_in)
        w = jax.random.uniform(wk, (fan_out, fan_in), dtype, -bound, bound)
        b = jax.random.uniform(bk, (fan_out,), dtype, -bound, bound)
        params.append((w, b))
    return params


def prepare_params(params, param_dtype=jnp.bfloat16):
    """One-time: transpose to (in, out), zero-pad feature dims to x128, and
    store weights in the MXU compute dtype (bf16 by default).  Biases stay
    f32 (applied in the f32 epilogue).  Zero padding is mathematically exact.
    Returns (padded_pytree, dims) with dims = static (fan_in, fan_out) tuple.
    """
    w_t_list, b_list, dims = [], [], []
    for w, b in params:
        fan_out, fan_in = w.shape
        k_pad = _round_up(fan_in, _LANE)
        n_pad = _round_up(fan_out, _LANE)
        w_t = jnp.zeros((k_pad, n_pad), param_dtype)
        w_t = w_t.at[:fan_in, :fan_out].set(w.T.astype(param_dtype))
        b_p = jnp.zeros((1, n_pad), jnp.float32)
        b_p = b_p.at[:, :fan_out].set(b.astype(jnp.float32)[None, :])
        w_t_list.append(w_t)
        b_list.append(b_p)
        dims.append((int(fan_in), int(fan_out)))
    return {"w_t": tuple(w_t_list), "b": tuple(b_list)}, tuple(dims)


# ---------------------------------------------------------------------------
# stop_layer handling: collapse the Sequential prefix into (linear, relu) pairs
# ---------------------------------------------------------------------------
def _fused_structure(layer_num, stop_layer):
    seq = [("linear", 0)]
    li = 1
    for _ in range(layer_num - 1):
        seq.append(("linear", li))
        li += 1
        seq.append(("relu", -1))
    seq.append(("linear", li))

    prefix = seq[:stop_layer]
    fused = []
    for kind, idx in prefix:
        if kind == "linear":
            fused.append((idx, False))
        else:  # ReLU always follows a Linear in this module
            i, _ = fused[-1]
            fused[-1] = (i, True)
    return tuple(fused)


# ---------------------------------------------------------------------------
# Tile-size selection from the VMEM budget
# ---------------------------------------------------------------------------
def _choose_tm(M, k0_pad, n_last_pad, max_np, resident_w_bytes, budget,
               io_itemsize):
    if budget is None:
        budget = 96 << 20
    per_row = (2 * k0_pad * io_itemsize        # double-buffered x tile
               + 2 * n_last_pad * io_itemsize  # double-buffered out tile
               + 3 * max_np * 4)               # f32 accumulator + temporaries
    avail = budget - resident_w_bytes
    tm_cap = max(_SUBLANE, (avail // max(per_row, 1)) // _SUBLANE * _SUBLANE)
    tm = int(min(512, tm_cap))
    if M <= tm:
        return max(_SUBLANE, _round_up(M, _SUBLANE))
    return max(_SUBLANE, tm)


def _resident_spec(shape, use_buffered):
    """Constant-index-map (revisited) BlockSpec, single-buffered if supported."""
    nd = len(shape)
    index_map = lambda i: (0,) * nd
    if use_buffered:
        return pl.BlockSpec(shape, index_map, pipeline_mode=pl.Buffered(1))
    return pl.BlockSpec(shape, index_map)


# ---------------------------------------------------------------------------
# Fused forward (equivalent of MLP.forward with stop_layer)
# ---------------------------------------------------------------------------
def mlp_forward(x, padded, dims, layer_num=2, stop_layer=None):
    structure = _fused_structure(layer_num, stop_layer)
    if not structure:                      # empty prefix -> identity
        return x

    M, K = x.shape
    w_list = [padded["w_t"][i] for i, _ in structure]
    b_list = [padded["b"][i] for i, _ in structure]
    relu_flags = tuple(r for _, r in structure)
    n_layers = len(w_list)

    k0_pad = w_list[0].shape[0]
    n_last_pad = w_list[-1].shape[1]
    max_np = max(w.shape[1] for w in w_list)
    out_dim = dims[structure[-1][0]][1]
    io_itemsize = jnp.dtype(x.dtype).itemsize

    weight_bytes = sum(w.size * w.dtype.itemsize for w in w_list)
    bias_bytes = sum(b.size * b.dtype.itemsize for b in b_list)

    use_buffered = bool(_BUFFERED_SUPPORTED)
    budget = _vmem_budget_bytes()
    w_buffers = 1 if use_buffered else 2
    # TODO(synk): if weight_bytes * w_buffers exceeds the per-TC budget
    # (v7x: 64 MiB), fall back to tiling the widest layer's N dim on the grid.

    tm = _choose_tm(M, k0_pad, n_last_pad, max_np, weight_bytes * w_buffers,
                    budget, io_itemsize)
    m_pad = _round_up(M, tm)
    grid = (m_pad // tm,)
    single_step = (m_pad == tm)

    # Skip wrapper-side padding when already aligned (no extra HBM pass).
    if M == m_pad and K == k0_pad:
        x_pad = x
    else:
        x_pad = jnp.zeros((m_pad, k0_pad), x.dtype).at[:M, :K].set(x)

    # Explicit, generation-aware VMEM limit (>= scoped default, <= budget).
    resident_w = weight_bytes * (1 if (single_step or use_buffered) else 2)
    needed = (resident_w + 2 * bias_bytes
              + 2 * tm * k0_pad * io_itemsize
              + 2 * tm * n_last_pad * io_itemsize
              + 3 * tm * max_np * 4)
    vmem_limit = None if budget is None else int(
        min(budget, max(32 << 20, needed * 3 // 2)))

    flops = sum(2 * m_pad * w.shape[0] * w.shape[1] for w in w_list)
    bytes_accessed = (x_pad.size * io_itemsize + weight_bytes + bias_bytes
                      + m_pad * n_last_pad * io_itemsize)
    cost = pl.CostEstimate(flops=flops, transcendentals=0,
                           bytes_accessed=bytes_accessed)  # advisory (padded)

    if single_step:
        # Small-batch path: weights stay in HBM (pl.ANY) and are manually
        # double-buffered across layers so weight DMA overlaps the matmuls.
        in_specs = [pl.BlockSpec((tm, k0_pad), lambda i: (0, 0))]
        inputs = [x_pad]
        for w, b in zip(w_list, b_list):
            in_specs.append(pl.BlockSpec(memory_space=pl.ANY))
            in_specs.append(_resident_spec(b.shape, use_buffered))
            inputs.extend((w, b))
        out_specs = pl.BlockSpec((tm, n_last_pad), lambda i: (0, 0))
        scratch = [pltpu.VMEM(w.shape, w.dtype) for w in w_list]
        scratch.append(pltpu.SemaphoreType.DMA((n_layers,)))

        out = pl.pallas_call(
            _make_prefetch_mlp_kernel(relu_flags),
            out_shape=jax.ShapeDtypeStruct((m_pad, n_last_pad), x.dtype),
            grid=grid,
            in_specs=in_specs,
            out_specs=out_specs,
            scratch_shapes=scratch,
            compiler_params=pltpu.CompilerParams(
                dimension_semantics=("arbitrary",),
                vmem_limit_bytes=vmem_limit),
            cost_estimate=cost,
        )(*inputs)
    else:
        # Multi-tile path: batch axis parallel (megacore); weights/biases are
        # revisited blocks (constant index map), single-buffered if supported.
        in_specs = [pl.BlockSpec((tm, k0_pad), lambda i: (i, 0))]
        inputs = [x_pad]
        for w, b in zip(w_list, b_list):
            in_specs.append(_resident_spec(w.shape, use_buffered))
            in_specs.append(_resident_spec(b.shape, use_buffered))
            inputs.extend((w, b))
        out_specs = pl.BlockSpec((tm, n_last_pad), lambda i: (i, 0))

        out = pl.pallas_call(
            _make_fused_mlp_kernel(relu_flags),
            out_shape=jax.ShapeDtypeStruct((m_pad, n_last_pad), x.dtype),
            grid=grid,
            in_specs=in_specs,
            out_specs=out_specs,
            compiler_params=pltpu.CompilerParams(
                dimension_semantics=("parallel",),
                vmem_limit_bytes=vmem_limit),
            cost_estimate=cost,
        )(*inputs)

    # Skip the un-pad slice when already aligned.
    if M == m_pad and out_dim == n_last_pad:
        return out
    return out[:M, :out_dim]


# ---------------------------------------------------------------------------
# Reference (plain JAX) for sanity checking
# ---------------------------------------------------------------------------
def mlp_reference(x, params, layer_num=2, stop_layer=None):
    ops = []
    it = iter(params)
    w, b = next(it)
    ops.append(lambda x, w=w, b=b: x @ w.T + b)
    for _ in range(layer_num - 1):
        w, b = next(it)
        ops.append(lambda x, w=w, b=b: x @ w.T + b)
        ops.append(lambda x: jnp.maximum(x, 0.0))
    w, b = next(it)
    ops.append(lambda x, w=w, b=b: x @ w.T + b)
    for op in ops[:stop_layer]:
        x = op(x)
    return x


if __name__ == "__main__":
    _probe_buffered_support()   # one-time capability probe (outside jit)

    in_dim, hid_dim, out_dim, layer_num = 16, 32, 8, 2
    batch = 8

    key = jax.random.PRNGKey(0)
    key, xk = jax.random.split(key)
    x = jax.random.normal(xk, (batch, in_dim), dtype=jnp.float32)
    key, xbk = jax.random.split(key)
    x_big = jax.random.normal(xbk, (1024, in_dim), dtype=jnp.float32)

    params = init_mlp_params(key, in_dim, hid_dim, out_dim, layer_num)
    padded_f32, dims = prepare_params(params, param_dtype=jnp.float32)
    padded_bf16, dims_b = prepare_params(params)       # default: bf16 weights
    assert dims == dims_b

    fwd = jax.jit(mlp_forward,
                  static_argnames=("dims", "layer_num", "stop_layer"))

    y_ref = mlp_reference(x, params, layer_num=layer_num)

    # 1) full forward, f32 weights, small batch (manual weight-prefetch path)
    y = jax.block_until_ready(fwd(x, padded_f32, dims, layer_num=layer_num))
    assert y.shape == (batch, out_dim)
    assert jnp.allclose(y, y_ref, atol=1e-5, rtol=1e-5)

    # 2) stop_layer prefix semantics (layers[:2] == two Linears, no ReLU)
    y_stop = jax.block_until_ready(
        fwd(x, padded_f32, dims, layer_num=layer_num, stop_layer=2))
    y_stop_ref = mlp_reference(x, params, layer_num=layer_num, stop_layer=2)
    assert y_stop.shape == (batch, hid_dim)
    assert jnp.allclose(y_stop, y_stop_ref, atol=1e-5, rtol=1e-5)

    # 3) default fast path: bf16 weights on the MXU, f32 acc + f32 epilogue
    y_bf16 = jax.block_until_ready(fwd(x, padded_bf16, dims,
                                       layer_num=layer_num))
    assert jnp.allclose(y_bf16, y_ref, atol=5e-2, rtol=5e-2)

    # 4) multi-tile batch (grid > 1, auto-pipelined revisited weights)
    y_big = jax.block_until_ready(fwd(x_big, padded_bf16, dims,
                                      layer_num=layer_num))
    y_big_ref = mlp_reference(x_big, params, layer_num=layer_num)
    assert y_big.shape == (1024, out_dim)
    assert jnp.allclose(y_big, y_big_ref, atol=5e-2, rtol=5e-2)

    print("KERNEL_OK")
</pallas_src>

<mosaic_0001>
module attributes {stable_mosaic.version = 11 : i64} {
  func.func @k(%arg0: i32, %arg1: memref<8x128xf32, #tpu.memory_space<vmem>>, %arg2: memref<8x128xf32, #tpu.memory_space<vmem>>) attributes {dimension_semantics = [#tpu.dimension_semantics<arbitrary>], iteration_bounds = array<i64: 2>, scalar_prefetch = 0 : i64, scratch_operands = 0 : i64, tpu.core_type = #tpu.core_type<tc>, window_params = [{pipeline_mode = #tpu.pipeline_mode<synchronous>, transform_indices = @transform_0, window_bounds = array<i64: 8, 128>}, {pipeline_mode = #tpu.pipeline_mode<synchronous>, transform_indices = @transform_1, window_bounds = array<i64: 8, 128>}]} {
    %c0 = arith.constant 0 : index
    %c0_0 = arith.constant 0 : index
    %0 = vector.load %arg1[%c0, %c0_0] : memref<8x128xf32, #tpu.memory_space<vmem>>, vector<8x128xf32>
    %c0_1 = arith.constant 0 : index
    %c0_2 = arith.constant 0 : index
    %1 = vector.load %arg2[%c0_1, %c0_2] : memref<8x128xf32, #tpu.memory_space<vmem>>, vector<8x128xf32>
    tpu.vector_store %arg2[%c0_1, %c0_2], %0 {strides = array<i32>} : memref<8x128xf32, #tpu.memory_space<vmem>>, vector<8x128xf32>,
    return
  }
  func.func @transform_0(%arg0: i32) -> (i32, i32) {
    %c0_i32 = arith.constant 0 : i32
    %c0_i32_0 = arith.constant 0 : i32
    %c0_i32_1 = arith.constant 0 : i32
    return %c0_i32, %c0_i32_0 : i32, i32
  }
  func.func @transform_1(%arg0: i32) -> (i32, i32) {
    %c0_i32 = arith.constant 0 : i32
    %c0_i32_0 = arith.constant 0 : i32
    %c0_i32_1 = arith.constant 0 : i32
    return %c0_i32, %c0_i32_0 : i32, i32
  }
}

module attributes {stable_mosaic.version = 11 : i64} {
  func.func @kernel(%arg0: i32, %arg1: memref<8x128xf32, #tpu.memory_space<vmem>>, %arg2: memref<128x128xf32, #tpu.memory_space<any>>, %arg3: memref<1x128xf32, #tpu.memory_space<vmem>>, %arg4: memref<128x128xf32, #tpu.memory_space<any>>, %arg5: memref<1x128xf32, #tpu.memory_space<vmem>>, %arg6: memref<128x128xf32, #tpu.memory_space<any>>, %arg7: memref<1x128xf32, #tpu.memory_space<vmem>>, %arg8: memref<8x128xf32, #tpu.memory_space<vmem>>, %arg9: memref<128x128xf32, #tpu.memory_space<vmem>>, %arg10: memref<128x128xf32, #tpu.memory_space<vmem>>, %arg11: memref<128x128xf32, #tpu.memory_space<vmem>>, %arg12: memref<3x!tpu.dma_semaphore, #tpu.memory_space<semaphore_mem>>) attributes {dimension_semantics = [#tpu.dimension_semantics<arbitrary>], iteration_bounds = array<i64: 1>, scalar_prefetch = 0 : i64, scratch_operands = 4 : i64, tpu.core_type = #tpu.core_type<tc>, window_params = [{pipeline_mode = #tpu.pipeline_mode<synchronous>, transform_indices = @transform_0, window_bounds = array<i64: 8, 128>}, {}, {pipeline_mode = #tpu.pipeline_mode<synchronous>, transform_indices = @transform_2, window_bounds = array<i64: 1, 128>}, {}, {pipeline_mode = #tpu.pipeline_mode<synchronous>, transform_indices = @transform_4, window_bounds = array<i64: 1, 128>}, {}, {pipeline_mode = #tpu.pipeline_mode<synchronous>, transform_indices = @transform_6, window_bounds = array<i64: 1, 128>}, {pipeline_mode = #tpu.pipeline_mode<synchronous>, transform_indices = @transform_7, window_bounds = array<i64: 8, 128>}]} {
    %c0_i32 = arith.constant 0 : i32
    %0 = tpu.memref_slice %arg12[%c0_i32] : memref<3x!tpu.dma_semaphore, #tpu.memory_space<semaphore_mem>> -> memref<1x!tpu.dma_semaphore, #tpu.memory_space<semaphore_mem>>
    %1 = tpu.memref_squeeze %0 : memref<1x!tpu.dma_semaphore, #tpu.memory_space<semaphore_mem>> -> memref<!tpu.dma_semaphore, #tpu.memory_space<semaphore_mem>>
    tpu.enqueue_dma source(%arg2 : memref<128x128xf32, #tpu.memory_space<any>>) target(%arg9 : memref<128x128xf32, #tpu.memory_space<vmem>>) target_semaphore(%1 : memref<!tpu.dma_semaphore, #tpu.memory_space<semaphore_mem>>)
    %c0 = arith.constant 0 : index
    %c0_0 = arith.constant 0 : index
    %2 = vector.load %arg1[%c0, %c0_0] : memref<8x128xf32, #tpu.memory_space<vmem>>, vector<8x128xf32>
    %c1_i32 = arith.constant 1 : i32
    %3 = tpu.memref_slice %arg12[%c1_i32] : memref<3x!tpu.dma_semaphore, #tpu.memory_space<semaphore_mem>> -> memref<1x!tpu.dma_semaphore, #tpu.memory_space<semaphore_mem>>
    %4 = tpu.memref_squeeze %3 : memref<1x!tpu.dma_semaphore, #tpu.memory_space<semaphore_mem>> -> memref<!tpu.dma_semaphore, #tpu.memory_space<semaphore_mem>>
    tpu.enqueue_dma source(%arg4 : memref<128x128xf32, #tpu.memory_space<any>>) target(%arg10 : memref<128x128xf32, #tpu.memory_space<vmem>>) target_semaphore(%4 : memref<!tpu.dma_semaphore, #tpu.memory_space<semaphore_mem>>)
    %c0_i32_1 = arith.constant 0 : i32
    %5 = tpu.memref_slice %arg12[%c0_i32_1] : memref<3x!tpu.dma_semaphore, #tpu.memory_space<semaphore_mem>> -> memref<1x!tpu.dma_semaphore, #tpu.memory_space<semaphore_mem>>
    %6 = tpu.memref_squeeze %5 : memref<1x!tpu.dma_semaphore, #tpu.memory_space<semaphore_mem>> -> memref<!tpu.dma_semaphore, #tpu.memory_space<semaphore_mem>>
    tpu.wait_dma2 semaphore(%6 : memref<!tpu.dma_semaphore, #tpu.memory_space<semaphore_mem>>) src(%arg2 : memref<128x128xf32, #tpu.memory_space<any>>) dst(%arg9 : memref<128x128xf32, #tpu.memory_space<vmem>>)
    %c0_2 = arith.constant 0 : index
    %c0_3 = arith.constant 0 : index
    %7 = vector.load %arg9[%c0_2, %c0_3] : memref<128x128xf32, #tpu.memory_space<vmem>>, vector<128x128xf32>
    %cst = arith.constant dense<0.000000e+00> : vector<8x128xf32>
    %8 = tpu.matmul %2, %7, %cst {dimension_numbers = #tpu.dot_dimension_numbers<[1], [0], [0], [1], [0, 0, 1, 1], [], []>} : vector<8x128xf32>, vector<128x128xf32>, vector<8x128xf32> -> vector<8x128xf32>
    %c0_4 = arith.constant 0 : index
    %c0_5 = arith.constant 0 : index
    %9 = vector.load %arg3[%c0_4, %c0_5] : memref<1x128xf32, #tpu.memory_space<vmem>>, vector<1x128xf32>
    %10 = vector.broadcast %9 : vector<1x128xf32> to vector<8x128xf32>
    %11 = arith.addf %8, %10 : vector<8x128xf32>
    %c2_i32 = arith.constant 2 : i32
    %12 = tpu.memref_slice %arg12[%c2_i32] : memref<3x!tpu.dma_semaphore, #tpu.memory_space<semaphore_mem>> -> memref<1x!tpu.dma_semaphore, #tpu.memory_space<semaphore_mem>>
    %13 = tpu.memref_squeeze %12 : memref<1x!tpu.dma_semaphore, #tpu.memory_space<semaphore_mem>> -> memref<!tpu.dma_semaphore, #tpu.memory_space<semaphore_mem>>
    tpu.enqueue_dma source(%arg6 : memref<128x128xf32, #tpu.memory_space<any>>) target(%arg11 : memref<128x128xf32, #tpu.memory_space<vmem>>) target_semaphore(%13 : memref<!tpu.dma_semaphore, #tpu.memory_space<semaphore_mem>>)
    %c1_i32_6 = arith.constant 1 : i32
    %14 = tpu.memref_slice %arg12[%c1_i32_6] : memref<3x!tpu.dma_semaphore, #tpu.memory_space<semaphore_mem>> -> memref<1x!tpu.dma_semaphore, #tpu.memory_space<semaphore_mem>>
    %15 = tpu.memref_squeeze %14 : memref<1x!tpu.dma_semaphore, #tpu.memory_space<semaphore_mem>> -> memref<!tpu.dma_semaphore, #tpu.memory_space<semaphore_mem>>
    tpu.wait_dma2 semaphore(%15 : memref<!tpu.dma_semaphore, #tpu.memory_space<semaphore_mem>>) src(%arg4 : memref<128x128xf32, #tpu.memory_space<any>>) dst(%arg10 : memref<128x128xf32, #tpu.memory_space<vmem>>)
    %c0_7 = arith.constant 0 : index
    %c0_8 = arith.constant 0 : index
    %16 = vector.load %arg10[%c0_7, %c0_8] : memref<128x128xf32, #tpu.memory_space<vmem>>, vector<128x128xf32>
    %cst_9 = arith.constant dense<0.000000e+00> : vector<8x128xf32>
    %17 = tpu.matmul %11, %16, %cst_9 {dimension_numbers = #tpu.dot_dimension_numbers<[1], [0], [0], [1], [0, 0, 1, 1], [], []>} : vector<8x128xf32>, vector<128x128xf32>, vector<8x128xf32> -> vector<8x128xf32>
    %c0_10 = arith.constant 0 : index
    %c0_11 = arith.constant 0 : index
    %18 = vector.load %arg5[%c0_10, %c0_11] : memref<1x128xf32, #tpu.memory_space<vmem>>, vector<1x128xf32>
    %19 = vector.broadcast %18 : vector<1x128xf32> to vector<8x128xf32>
    %20 = arith.addf %17, %19 : vector<8x128xf32>
    %cst_12 = arith.constant 0.000000e+00 : f32
    %21 = vector.broadcast %cst_12 : f32 to vector<8x128xf32>
    %22 = arith.maximumf %20, %21 : vector<8x128xf32>
    %c2_i32_13 = arith.constant 2 : i32
    %23 = tpu.memref_slice %arg12[%c2_i32_13] : memref<3x!tpu.dma_semaphore, #tpu.memory_space<semaphore_mem>> -> memref<1x!tpu.dma_semaphore, #tpu.memory_space<semaphore_mem>>
    %24 = tpu.memref_squeeze %23 : memref<1x!tpu.dma_semaphore, #tpu.memory_space<semaphore_mem>> -> memref<!tpu.dma_semaphore, #tpu.memory_space<semaphore_mem>>
    tpu.wait_dma2 semaphore(%24 : memref<!tpu.dma_semaphore, #tpu.memory_space<semaphore_mem>>) src(%arg6 : memref<128x128xf32, #tpu.memory_space<any>>) dst(%arg11 : memref<128x128xf32, #tpu.memory_space<vmem>>)
    %c0_14 = arith.constant 0 : index
    %c0_15 = arith.constant 0 : index
    %25 = vector.load %arg11[%c0_14, %c0_15] : memref<128x128xf32, #tpu.memory_space<vmem>>, vector<128x128xf32>
    %cst_16 = arith.constant dense<0.000000e+00> : vector<8x128xf32>
    %26 = tpu.matmul %22, %25, %cst_16 {dimension_numbers = #tpu.dot_dimension_numbers<[1], [0], [0], [1], [0, 0, 1, 1], [], []>} : vector<8x128xf32>, vector<128x128xf32>, vector<8x128xf32> -> vector<8x128xf32>
    %c0_17 = arith.constant 0 : index
    %c0_18 = arith.constant 0 : index
    %27 = vector.load %arg7[%c0_17, %c0_18] : memref<1x128xf32, #tpu.memory_space<vmem>>, vector<1x128xf32>
    %28 = vector.broadcast %27 : vector<1x128xf32> to vector<8x128xf32>
    %29 = arith.addf %26, %28 : vector<8x128xf32>
    %c0_19 = arith.constant 0 : index
    %c0_20 = arith.constant 0 : index
    %30 = vector.load %arg8[%c0_19, %c0_20] : memref<8x128xf32, #tpu.memory_space<vmem>>, vector<8x128xf32>
    tpu.vector_store %arg8[%c0_19, %c0_20], %29 {strides = array<i32>} : memref<8x128xf32, #tpu.memory_space<vmem>>, vector<8x128xf32>,
    return
  }
  func.func @transform_0(%arg0: i32) -> (i32, i32) {
    %c0_i32 = arith.constant 0 : i32
    %c0_i32_0 = arith.constant 0 : i32
    %c0_i32_1 = arith.constant 0 : i32
    return %c0_i32, %c0_i32_0 : i32, i32
  }
  func.func @transform_2(%arg0: i32) -> (i32, i32) {
    %c0_i32 = arith.constant 0 : i32
    %c0_i32_0 = arith.constant 0 : i32
    %c0_i32_1 = arith.constant 0 : i32
    return %c0_i32, %c0_i32_0 : i32, i32
  }
  func.func @transform_4(%arg0: i32) -> (i32, i32) {
    %c0_i32 = arith.constant 0 : i32
    %c0_i32_0 = arith.constant 0 : i32
    %c0_i32_1 = arith.constant 0 : i32
    return %c0_i32, %c0_i32_0 : i32, i32
  }
  func.func @transform_6(%arg0: i32) -> (i32, i32) {
    %c0_i32 = arith.constant 0 : i32
    %c0_i32_0 = arith.constant 0 : i32
    %c0_i32_1 = arith.constant 0 : i32
    return %c0_i32, %c0_i32_0 : i32, i32
  }
  func.func @transform_7(%arg0: i32) -> (i32, i32) {
    %c0_i32 = arith.constant 0 : i32
    %c0_i32_0 = arith.constant 0 : i32
    %c0_i32_1 = arith.constant 0 : i32
    return %c0_i32, %c0_i32_0 : i32, i32
  }
}

</mosaic_0001>

<llo_original>
// kernel: tpu_custom_call.1
$region0: #{tpu_custom_call.1}
  #allocation0 [shape = 'u32[]', space=smem, size = 0x4, offset = 0x4, fixed_abs, tag = 'smem constant byte address 0x4 - core index']
  #allocation1 [shape = 'u32[144,128]{1,0:T(1,128)}', space=vmem, size = 0x12000, scoped, tag = 'internal scratch']
  %s0 = inlined_call_operand.hbm [shape: f32[8,128], index: 0, kind: input, shape index: {}]
  %s1 = inlined_call_operand.hbm [shape: f32[8,128], index: 1, kind: output, shape index: {}]
  %s2 = sld [smem:[#allocation0]]
  $region41: #{tpu_custom_call.1} parent=0
    _
  %s4 = ssub.s32 1, %s2
  %s5 = scalar_select 0, %s4, %s2
  $region1: #{tpu_custom_call.1} parent=0
    #allocation2 [shape = 'u8[4096]{0}', space=vmem, size = 0x1000, scoped, tag = 'input window, operand 0, single buffered']
    #allocation3 [shape = 's32[2]{0}', space=sflag, size = 0x8, scoped, tag = 'scoped memory for tpu_custom_call.1']
    #allocation4 [shape = 's32[2]{0}', space=sflag, size = 0x8, scoped, tag = 'scoped memory for tpu_custom_call.1']
    #allocation5 [shape = 'u8[4096]{0}', space=vmem, size = 0x1000, scoped, tag = 'output window, operand 0, single buffered']
    %6 = vsyncpa [#allocation3], 0
    %7 = vsyncpa [#allocation4], 0
    loop: start=0, step=1, limit=4
    $region2: #{tpu_custom_call.1} parent=1 // loop_pre_header
      _
    $region3: #{tpu_custom_call.1} parent=1 // loop_header
      %s9 = sphi 0, %s13
      %p10 = scmp.ge.s32.totalorder %s9, 4
      %s17 = sphi 0, %s17
      %s19 = sphi 0, %s17
      %s20 = sphi 0, %s19
      %s34 = sphi 0, %s20
      %s38 = sphi 0, %s38
      %s40 = sphi 0, %s38
      %s41 = sphi 0, %s40
      %s55 = sphi 0, %s41
    $region4: #{tpu_custom_call.1} parent=1 // loop_header_branch
      %12 = sbr.rel (%p10) target = $region8
    $region5: #{tpu_custom_call.1} parent=1 // loop_body
      %s14 = ssub.s32 %s9, 1
      %s15 = ssub.s32 %s9, 2
      %s16 = sadd.s32 %s9, 1
      %s18 = sadd.s32 %s17, 1
      %p21 = scmp.eq.s32.totalorder %s9, 1
      %p22 = scmp.ne.s32.totalorder %s17, %s19
      %p23 = scmp.eq.s32.totalorder %s9, 0
      %p24 = por %p22, %p23
      %p25 = scmp.ne.s32.totalorder %s17, %s19
      %p26 = scmp.eq.s32.totalorder %s14, 1
      %p27 = por %p25, %p26
      %p28 = scmp.ne.s32.totalorder %s19, %s20
      %p29 = scmp.eq.s32.totalorder %s14, 0
      %p30 = por %p28, %p29
      %p31 = scmp.ne.s32.totalorder %s19, %s20
      %p32 = scmp.eq.s32.totalorder %s15, 1
      %p33 = por %p31, %p32
      %p35 = scmp.ne.s32.totalorder %s20, %s34
      %p36 = scmp.eq.s32.totalorder %s15, 0
      %p37 = por %p35, %p36
      %s39 = sadd.s32 %s38, 1
      %p42 = scmp.eq.s32.totalorder %s9, 1
      %p43 = scmp.ne.s32.totalorder %s38, %s40
      %p44 = scmp.eq.s32.totalorder %s9, 0
      %p45 = por %p43, %p44
      %p46 = scmp.ne.s32.totalorder %s38, %s40
      %p47 = scmp.eq.s32.totalorder %s14, 1
      %p48 = por %p46, %p47
      %p49 = scmp.ne.s32.totalorder %s40, %s41
      %p50 = scmp.eq.s32.totalorder %s14, 0
      %p51 = por %p49, %p50
      %p52 = scmp.ne.s32.totalorder %s40, %s41
      %p53 = scmp.eq.s32.totalorder %s15, 1
      %p54 = por %p52, %p53
      %p56 = scmp.ne.s32.totalorder %s41, %s55
      %p57 = scmp.eq.s32.totalorder %s15, 0
      %p58 = por %p56, %p57
      %p59 = scmp.le.s32.totalorder 1, %s9
      %p60 = scmp.lt.s32.totalorder %s9, 3
      %p61 = pnand %p59, %p60
      %p62 = pneg %p61
      // Predicated region
      $region9: #{tpu_custom_call.1} parent=5 // pred_check
        _
      $region10: #{tpu_custom_call.1} parent=5 // pred_check_branch
        %64 = sbr.rel (%p61) target = $region12
      $region11: #{tpu_custom_call.1} parent=5 // pred_region
        %s65 = ssub.s32 %s9, 1
        // Predicated region
        $region13: #{tpu_custom_call.1} parent=11 // pred_check
          %p66 = pneg %p30
        $region14: #{tpu_custom_call.1} parent=11 // pred_check_branch
          %68 = sbr.rel (%p66) target = $region16
        $region15: #{tpu_custom_call.1} parent=11 // pred_region
          %s70 = ssub.s32 128, 128
          %71 = vsyncadd [#allocation3], %s70
          %s73 = sshll.u32 [#allocation2], 4
          %s74 = int_to_ptr.vmem [resolvable:$true] %s73
          %76 = dma.hbm_to_vmem [thread:$0]  %s0, 128, %s74, [#allocation3]
        $region16: #{tpu_custom_call.1} parent=11 // pred_fallthru
          _
      $region12: #{tpu_custom_call.1} parent=5 // pred_fallthru
        _
      %p77 = scmp.lt.s32.totalorder %s9, 2
      // Predicated region
      $region17: #{tpu_custom_call.1} parent=5 // pred_check
        %p78 = pneg %p77
      $region18: #{tpu_custom_call.1} parent=5 // pred_check_branch
        %80 = sbr.rel (%p78) target = $region20
      $region19: #{tpu_custom_call.1} parent=5 // pred_region
        _
      $region20: #{tpu_custom_call.1} parent=5 // pred_fallthru
        _
      %p81 = scmp.le.s32.totalorder 1, %s9
      %p82 = scmp.lt.s32.totalorder %s9, 3
      %p83 = pnand %p81, %p82
      %p84 = pneg %p83
      // Predicated region
      $region21: #{tpu_custom_call.1} parent=5 // pred_check
        _
      $region22: #{tpu_custom_call.1} parent=5 // pred_check_branch
        %86 = sbr.rel (%p83) target = $region24
      $region23: #{tpu_custom_call.1} parent=5 // pred_region
        %s87 = ssub.s32 %s9, 1
        // Predicated region
        $region25: #{tpu_custom_call.1} parent=23 // pred_check
          %p88 = pneg %p30
        $region26: #{tpu_custom_call.1} parent=23 // pred_check_branch
          %90 = sbr.rel (%p88) target = $region28
        $region27: #{tpu_custom_call.1} parent=23 // pred_region
          %91 = dma.done [#allocation3], 128
        $region28: #{tpu_custom_call.1} parent=23 // pred_fallthru
          _
        %p92 = pneg %p30
        %p93 = pneg %p27
        %p94 = pneg %p51
        %p95 = pneg %p48
        %v96 = vld [vmem:[#allocation2] sm:$0xff]
        %97 = vst [vmem:[#allocation5] sm:$0xff] %v96
        // Predicated region
        $region29: #{tpu_custom_call.1} parent=23 // pred_check
          %p98 = pneg %p48
        $region30: #{tpu_custom_call.1} parent=23 // pred_check_branch
          %100 = sbr.rel (%p98) target = $region32
        $region31: #{tpu_custom_call.1} parent=23 // pred_region
          %s102 = ssub.s32 128, 128
          %103 = vsyncadd [#allocation4], %s102
          %s105 = sshll.u32 [#allocation5], 4
          %s106 = int_to_ptr.vmem [resolvable:$true] %s105
          %108 = dma.vmem_to_hbm [thread:$0]  %s106, 128, %s1, [#allocation4]
        $region32: #{tpu_custom_call.1} parent=23 // pred_fallthru
          _
        // Predicated region
        $region33: #{tpu_custom_call.1} parent=23 // pred_check
          %p109 = pneg %p48
        $region34: #{tpu_custom_call.1} parent=23 // pred_check_branch
          %111 = sbr.rel (%p109) target = $region36
        $region35: #{tpu_custom_call.1} parent=23 // pred_region
          %112 = dma.done [#allocation4], 128
        $region36: #{tpu_custom_call.1} parent=23 // pred_fallthru
          _
      $region24: #{tpu_custom_call.1} parent=5 // pred_fallthru
        _
      %p113 = scmp.le.s32.totalorder 2, %s9
      // Predicated region
      $region37: #{tpu_custom_call.1} parent=5 // pred_check
        %p114 = pneg %p113
      $region38: #{tpu_custom_call.1} parent=5 // pred_check_branch
        %116 = sbr.rel (%p114) target = $region40
      $region39: #{tpu_custom_call.1} parent=5 // pred_region
        %s117 = ssub.s32 %s9, 2
      $region40: #{tpu_custom_call.1} parent=5 // pred_fallthru
        _
    $region6: #{tpu_custom_call.1} parent=1 // loop_footer
      %s13 = sadd.s32 1, %s9
    $region7: #{tpu_custom_call.1} parent=1 // loop_footer_branch
      %8 = sbr.rel target = $region3
    $region8: #{tpu_custom_call.1} parent=1 // loop_exit
      _
    %118 = vsyncpa [#allocation3], 1
    %s119 = scalar_lea.sflag [#allocation3], 1
    %120 = vsyncpa %s119, 1
    %121 = vsyncpa [#allocation4], 1
    %s122 = scalar_lea.sflag [#allocation4], 1
    %123 = vsyncpa %s122, 1

// kernel: mlp_forward.1
$region0: #{mlp_forward.1}
  #allocation0 [shape = 'u32[]', space=smem, size = 0x4, offset = 0x4, fixed_abs, tag = 'smem constant byte address 0x4 - core index']
  #allocation1 [shape = 'u32[144,128]{1,0:T(1,128)}', space=vmem, size = 0x12000, scoped, tag = 'internal scratch']
  #allocation2 [shape = 'f32[128,128]{1,0:T(8,128)}', space=vmem, size = 0x10000, scoped, tag = 'scratch operand']
  #allocation3 [shape = 'f32[128,128]{1,0:T(8,128)}', space=vmem, size = 0x10000, scoped, tag = 'scratch operand']
  #allocation4 [shape = 'f32[128,128]{1,0:T(8,128)}', space=vmem, size = 0x10000, scoped, tag = 'scratch operand']
  #allocation5 [shape = 's32[3]{0}', space=sflag, size = 0xc, scoped, tag = 'scratch operand']
  #allocation8 [shape = 's32[]', space=sflag, size = 0x4, offset = 0, fixed_abs, tag = 'sflag constant byte address 0x0 - dummy sync flag']
  #allocation9 [shape = 's32[]', space=sflag, size = 0x4, offset = 0, fixed_abs, tag = 'sflag constant byte address 0x0 - dummy sync flag']
  #allocation10 [shape = 'u32[]', space=smem, size = 0x4, offset = 0x44, fixed_abs, tag = 'smem constant byte address 0x44 - assertion arg 0']
  #allocation11 [shape = 'u32[]', space=smem, size = 0x4, offset = 0x48, fixed_abs, tag = 'smem constant byte address 0x48 - assertion arg 1']
  #allocation12 [shape = 's32[]', space=sflag, size = 0x4, offset = 0, fixed_abs, tag = 'sflag constant byte address 0x0 - dummy sync flag']
  #allocation13 [shape = 's32[]', space=sflag, size = 0x4, offset = 0, fixed_abs, tag = 'sflag constant byte address 0x0 - dummy sync flag']
  #allocation14 [shape = 's32[]', space=sflag, size = 0x4, offset = 0, fixed_abs, tag = 'sflag constant byte address 0x0 - dummy sync flag']
  #allocation15 [shape = 's32[]', space=sflag, size = 0x4, offset = 0, fixed_abs, tag = 'sflag constant byte address 0x0 - dummy sync flag']
  %s0 = inlined_call_operand.vmem [shape: f32[8,128], index: 0, kind: input, shape index: {}]
  %s1 = inlined_call_operand.hbm [shape: f32[128,128], index: 1, kind: input, shape index: {}]
  %s2 = inlined_call_operand.vmem [shape: f32[1,128], index: 2, kind: input, shape index: {}]
  %s3 = inlined_call_operand.hbm [shape: f32[128,128], index: 3, kind: input, shape index: {}]
  %s4 = inlined_call_operand.vmem [shape: f32[1,128], index: 4, kind: input, shape index: {}]
  %s5 = inlined_call_operand.hbm [shape: f32[128,128], index: 5, kind: input, shape index: {}]
  %s6 = inlined_call_operand.vmem [shape: f32[1,128], index: 6, kind: input, shape index: {}]
  %s7 = inlined_call_operand.hbm [shape: f32[8,128], index: 7, kind: output, shape index: {}]
  %s8 = sld [smem:[#allocation0]]
  $region38: #{mlp_forward.1} parent=0
    _
  %s10 = ssub.s32 1, %s8
  %s11 = scalar_select 0, %s10, %s8
  $region1: #{mlp_forward.1} parent=0
    #allocation6 [shape = 'u8[4096]{0}', space=vmem, size = 0x1000, scoped, tag = 'output window, operand 0, single buffered']
    #allocation7 [shape = 's32[1]{0}', space=sflag, size = 0x4, scoped, tag = 'scoped memory for mlp_forward.1']
    %12 = vsyncpa [#allocation7], 0
    // Predicated region
    $region2: #{mlp_forward.1} parent=1 // pred_check
      _
    $region3: #{mlp_forward.1} parent=1 // pred_check_branch
      %14 = sbr.rel (0) target = $region5
    $region4: #{mlp_forward.1} parent=1 // pred_region
      _
    $region5: #{mlp_forward.1} parent=1 // pred_fallthru
      _
    // Predicated region
    $region6: #{mlp_forward.1} parent=1 // pred_check
      _
    $region7: #{mlp_forward.1} parent=1 // pred_check_branch
      %16 = sbr.rel (0) target = $region9
    $region8: #{mlp_forward.1} parent=1 // pred_region
      _
    $region9: #{mlp_forward.1} parent=1 // pred_fallthru
      _
    // Predicated region
    $region10: #{mlp_forward.1} parent=1 // pred_check
      _
    $region11: #{mlp_forward.1} parent=1 // pred_check_branch
      %18 = sbr.rel (0) target = $region13
    $region12: #{mlp_forward.1} parent=1 // pred_region
      _
    $region13: #{mlp_forward.1} parent=1 // pred_fallthru
      _
    // Predicated region
    $region14: #{mlp_forward.1} parent=1 // pred_check
      _
    $region15: #{mlp_forward.1} parent=1 // pred_check_branch
      %20 = sbr.rel (0) target = $region17
    $region16: #{mlp_forward.1} parent=1 // pred_region
      _
    $region17: #{mlp_forward.1} parent=1 // pred_fallthru
      _
    // Predicated region
    $region18: #{mlp_forward.1} parent=1 // pred_check
      _
    $region19: #{mlp_forward.1} parent=1 // pred_check_branch
      %22 = sbr.rel target = $region21
    $region20: #{mlp_forward.1} parent=1 // pred_region
      %23 = sst [smem:[#allocation10]] [#allocation9]
      %24 = sst [smem:[#allocation11]] [#allocation8]
    $region21: #{mlp_forward.1} parent=1 // pred_fallthru
      _
    %26 = shalt.err (0)
    %s28 = sshll.u32 [#allocation2], 4
    %s29 = int_to_ptr.vmem [resolvable:$true] %s28
    %31 = dma.hbm_to_vmem [thread:$0]  %s1, 2048, %s29, [#allocation5]
    %v32 = vld [vmem:[%s0] sm:$0xff]
    %s33 = scalar_lea.sflag [#allocation5], 1
    // Predicated region
    $region22: #{mlp_forward.1} parent=1 // pred_check
      _
    $region23: #{mlp_forward.1} parent=1 // pred_check_branch
      %35 = sbr.rel target = $region25
    $region24: #{mlp_forward.1} parent=1 // pred_region
      %36 = sst [smem:[#allocation10]] [#allocation13]
      %37 = sst [smem:[#allocation11]] [#allocation12]
    $region25: #{mlp_forward.1} parent=1 // pred_fallthru
      _
    %39 = shalt.err (0)
    %s41 = sshll.u32 [#allocation3], 4
    %s42 = int_to_ptr.vmem [resolvable:$true] %s41
    %44 = dma.hbm_to_vmem [thread:$0]  %s3, 2048, %s42, %s33
    %s45 = smul.u32 128, 1
    %s46 = sshll.u32 %s45, 4
    %47 = dma.done [#allocation5], %s46
    %v48 = vld [vmem:[#allocation2] sm:$0xff]
    %v49 = vld [vmem:[#allocation2 + $0x8] sm:$0xff]
    %v50 = vld [vmem:[#allocation2 + $0x10] sm:$0xff]
    %v51 = vld [vmem:[#allocation2 + $0x18] sm:$0xff]
    %v52 = vld [vmem:[#allocation2 + $0x20] sm:$0xff]
    %v53 = vld [vmem:[#allocation2 + $0x28] sm:$0xff]
    %v54 = vld [vmem:[#allocation2 + $0x30] sm:$0xff]
    %v55 = vld [vmem:[#allocation2 + $0x38] sm:$0xff]
    %v56 = vld [vmem:[#allocation2 + $0x40] sm:$0xff]
    %v57 = vld [vmem:[#allocation2 + $0x48] sm:$0xff]
    %v58 = vld [vmem:[#allocation2 + $0x50] sm:$0xff]
    %v59 = vld [vmem:[#allocation2 + $0x58] sm:$0xff]
    %v60 = vld [vmem:[#allocation2 + $0x60] sm:$0xff]
    %v61 = vld [vmem:[#allocation2 + $0x68] sm:$0xff]
    %v62 = vld [vmem:[#allocation2 + $0x70] sm:$0xff]
    %v63 = vld [vmem:[#allocation2 + $0x78] sm:$0xff]
    %v64 = vld [vmem:[%s2] sm:$0x1]
    %v66 = vlaneseq
    %v67 = vshrl.u32 %v66, 7
    %v68 = vsub.s32 0, %v67
    %v69 = vrot.slane %v64, %v68
    %71 = vmatprep.subr.mxu0 0.0
    %72 = vmatpush1.msra.mxu0 %v48
    %73 = vmatprep.subr.mxu0 0.0
    %74 = vmatpush1.msra.mxu0 %v49
    %75 = vmatprep.subr.mxu0 0.0
    %76 = vmatpush1.msra.mxu0 %v50
    %77 = vmatprep.subr.mxu0 0.0
    %78 = vmatpush1.msra.mxu0 %v51
    %79 = vmatprep.subr.mxu0 0.0
    %80 = vmatpush1.msra.mxu0 %v52
    %81 = vmatprep.subr.mxu0 0.0
    %82 = vmatpush1.msra.mxu0 %v53
    %83 = vmatprep.subr.mxu0 0.0
    %84 = vmatpush1.msra.mxu0 %v54
    %85 = vmatprep.subr.mxu0 0.0
    %86 = vmatpush1.msra.mxu0 %v55
    %87 = vmatprep.subr.mxu0 0.0
    %88 = vmatpush1.msra.mxu0 %v56
    %89 = vmatprep.subr.mxu0 0.0
    %90 = vmatpush1.msra.mxu0 %v57
    %91 = vmatprep.subr.mxu0 0.0
    %92 = vmatpush1.msra.mxu0 %v58
    %93 = vmatprep.subr.mxu0 0.0
    %94 = vmatpush1.msra.mxu0 %v59
    %95 = vmatprep.subr.mxu0 0.0
    %96 = vmatpush1.msra.mxu0 %v60
    %97 = vmatprep.subr.mxu0 0.0
    %98 = vmatpush1.msra.mxu0 %v61
    %99 = vmatprep.subr.mxu0 0.0
    %100 = vmatpush1.msra.mxu0 %v62
    %101 = vmatprep.subr.mxu0 0.0
    %102 = vmatpush1.msra.mxu0 %v63
    %103 = vmatprep.subr.mxu0 0.0
    %104 = vmatpush1.msra.mxu0 0.0
    %105 = vmatprep.subr.mxu0 0.0
    %106 = vmatpush1.msra.mxu0 0.0
    %107 = vmatprep.subr.mxu0 0.0
    %108 = vmatpush1.msra.mxu0 0.0
    %109 = vmatprep.subr.mxu0 0.0
    %110 = vmatpush1.msra.mxu0 0.0
    %111 = vmatprep.subr.mxu0 0.0
    %112 = vmatpush1.msra.mxu0 0.0
    %113 = vmatprep.subr.mxu0 0.0
    %114 = vmatpush1.msra.mxu0 0.0
    %115 = vmatprep.subr.mxu0 0.0
    %116 = vmatpush1.msra.mxu0 0.0
    %117 = vmatprep.subr.mxu0 0.0
    %118 = vmatpush1.msra.mxu0 0.0
    %119 = vmatprep.subr.mxu0 0.0
    %120 = vmatpush1.msra.mxu0 0.0
    %121 = vmatprep.subr.mxu0 0.0
    %122 = vmatpush1.msra.mxu0 0.0
    %123 = vmatprep.subr.mxu0 0.0
    %124 = vmatpush1.msra.mxu0 0.0
    %125 = vmatprep.subr.mxu0 0.0
    %126 = vmatpush1.msra.mxu0 0.0
    %127 = vmatprep.subr.mxu0 0.0
    %128 = vmatpush1.msra.mxu0 0.0
    %129 = vmatprep.subr.mxu0 0.0
    %130 = vmatpush1.msra.mxu0 0.0
    %131 = vmatprep.subr.mxu0 0.0
    %132 = vmatpush1.msra.mxu0 0.0
    %133 = vmatprep.subr.mxu0 0.0
    %134 = vmatpush1.msra.mxu0 0.0
    %135 = vmatprep.mubr.f32.mxu0 0.0
    %136 = vmatmul.mubr.f32.gmra.mrb[0].mxu0 %v32
    %v137 = vpop.f32.mrb[0].mxu0
    %v138 = vadd.f32 %v69, %v137
    %v139 = vpop.f32.mrb[0].mxu0
    %140 = vdwg.mxu0
    %s141 = scalar_lea.sflag [#allocation5], 2
    // Predicated region
    $region26: #{mlp_forward.1} parent=1 // pred_check
      _
    $region27: #{mlp_forward.1} parent=1 // pred_check_branch
      %143 = sbr.rel target = $region29
    $region28: #{mlp_forward.1} parent=1 // pred_region
      %144 = sst [smem:[#allocation10]] [#allocation15]
      %145 = sst [smem:[#allocation11]] [#allocation14]
    $region29: #{mlp_forward.1} parent=1 // pred_fallthru
      _
    %147 = shalt.err (0)
    %s149 = sshll.u32 [#allocation4], 4
    %s150 = int_to_ptr.vmem [resolvable:$true] %s149
    %152 = dma.hbm_to_vmem [thread:$0]  %s5, 2048, %s150, %s141
    %s153 = sshll.u32 %s45, 4
    %154 = dma.done %s33, %s153
    %v155 = vld [vmem:[#allocation3] sm:$0xff]
    %v156 = vld [vmem:[#allocation3 + $0x8] sm:$0xff]
    %v157 = vld [vmem:[#allocation3 + $0x10] sm:$0xff]
    %v158 = vld [vmem:[#allocation3 + $0x18] sm:$0xff]
    %v159 = vld [vmem:[#allocation3 + $0x20] sm:$0xff]
    %v160 = vld [vmem:[#allocation3 + $0x28] sm:$0xff]
    %v161 = vld [vmem:[#allocation3 + $0x30] sm:$0xff]
    %v162 = vld [vmem:[#allocation3 + $0x38] sm:$0xff]
    %v163 = vld [vmem:[#allocation3 + $0x40] sm:$0xff]
    %v164 = vld [vmem:[#allocation3 + $0x48] sm:$0xff]
    %v165 = vld [vmem:[#allocation3 + $0x50] sm:$0xff]
    %v166 = vld [vmem:[#allocation3 + $0x58] sm:$0xff]
    %v167 = vld [vmem:[#allocation3 + $0x60] sm:$0xff]
    %v168 = vld [vmem:[#allocation3 + $0x68] sm:$0xff]
    %v169 = vld [vmem:[#allocation3 + $0x70] sm:$0xff]
    %v170 = vld [vmem:[#allocation3 + $0x78] sm:$0xff]
    %v171 = vld [vmem:[%s4] sm:$0x1]
    %v173 = vlaneseq
    %v174 = vshrl.u32 %v173, 7
    %v175 = vsub.s32 0, %v174
    %v176 = vrot.slane %v171, %v175
    %178 = vmatprep.subr.mxu0 0.0
    %179 = vmatpush1.msra.mxu0 %v155
    %180 = vmatprep.subr.mxu0 0.0
    %181 = vmatpush1.msra.mxu0 %v156
    %182 = vmatprep.subr.mxu0 0.0
    %183 = vmatpush1.msra.mxu0 %v157
    %184 = vmatprep.subr.mxu0 0.0
    %185 = vmatpush1.msra.mxu0 %v158
    %186 = vmatprep.subr.mxu0 0.0
    %187 = vmatpush1.msra.mxu0 %v159
    %188 = vmatprep.subr.mxu0 0.0
    %189 = vmatpush1.msra.mxu0 %v160
    %190 = vmatprep.subr.mxu0 0.0
    %191 = vmatpush1.msra.mxu0 %v161
    %192 = vmatprep.subr.mxu0 0.0
    %193 = vmatpush1.msra.mxu0 %v162
    %194 = vmatprep.subr.mxu0 0.0
    %195 = vmatpush1.msra.mxu0 %v163
    %196 = vmatprep.subr.mxu0 0.0
    %197 = vmatpush1.msra.mxu0 %v164
    %198 = vmatprep.subr.mxu0 0.0
    %199 = vmatpush1.msra.mxu0 %v165
    %200 = vmatprep.subr.mxu0 0.0
    %201 = vmatpush1.msra.mxu0 %v166
    %202 = vmatprep.subr.mxu0 0.0
    %203 = vmatpush1.msra.mxu0 %v167
    %204 = vmatprep.subr.mxu0 0.0
    %205 = vmatpush1.msra.mxu0 %v168
    %206 = vmatprep.subr.mxu0 0.0
    %207 = vmatpush1.msra.mxu0 %v169
    %208 = vmatprep.subr.mxu0 0.0
    %209 = vmatpush1.msra.mxu0 %v170
    %210 = vmatprep.subr.mxu0 0.0
    %211 = vmatpush1.msra.mxu0 0.0
    %212 = vmatprep.subr.mxu0 0.0
    %213 = vmatpush1.msra.mxu0 0.0
    %214 = vmatprep.subr.mxu0 0.0
    %215 = vmatpush1.msra.mxu0 0.0
    %216 = vmatprep.subr.mxu0 0.0
    %217 = vmatpush1.msra.mxu0 0.0
    %218 = vmatprep.subr.mxu0 0.0
    %219 = vmatpush1.msra.mxu0 0.0
    %220 = vmatprep.subr.mxu0 0.0
    %221 = vmatpush1.msra.mxu0 0.0
    %222 = vmatprep.subr.mxu0 0.0
    %223 = vmatpush1.msra.mxu0 0.0
    %224 = vmatprep.subr.mxu0 0.0
    %225 = vmatpush1.msra.mxu0 0.0
    %226 = vmatprep.subr.mxu0 0.0
    %227 = vmatpush1.msra.mxu0 0.0
    %228 = vmatprep.subr.mxu0 0.0
    %229 = vmatpush1.msra.mxu0 0.0
    %230 = vmatprep.subr.mxu0 0.0
    %231 = vmatpush1.msra.mxu0 0.0
    %232 = vmatprep.subr.mxu0 0.0
    %233 = vmatpush1.msra.mxu0 0.0
    %234 = vmatprep.subr.mxu0 0.0
    %235 = vmatpush1.msra.mxu0 0.0
    %236 = vmatprep.subr.mxu0 0.0
    %237 = vmatpush1.msra.mxu0 0.0
    %238 = vmatprep.subr.mxu0 0.0
    %239 = vmatpush1.msra.mxu0 0.0
    %240 = vmatprep.subr.mxu0 0.0
    %241 = vmatpush1.msra.mxu0 0.0
    %242 = vmatprep.mubr.f32.mxu0 0.0
    %243 = vmatmul.mubr.f32.gmra.mrb[0].mxu0 %v138
    %v244 = vpop.f32.mrb[0].mxu0
    %v245 = vadd.f32 %v176, %v244
    %v246 = vpop.f32.mrb[0].mxu0
    %247 = vdwg.mxu0
    %v248 = vmax.f32 %v245, 0.0
    %s249 = sshll.u32 %s45, 4
    %250 = dma.done %s141, %s249
    %v251 = vld [vmem:[#allocation4] sm:$0xff]
    %v252 = vld [vmem:[#allocation4 + $0x8] sm:$0xff]
    %v253 = vld [vmem:[#allocation4 + $0x10] sm:$0xff]
    %v254 = vld [vmem:[#allocation4 + $0x18] sm:$0xff]
    %v255 = vld [vmem:[#allocation4 + $0x20] sm:$0xff]
    %v256 = vld [vmem:[#allocation4 + $0x28] sm:$0xff]
    %v257 = vld [vmem:[#allocation4 + $0x30] sm:$0xff]
    %v258 = vld [vmem:[#allocation4 + $0x38] sm:$0xff]
    %v259 = vld [vmem:[#allocation4 + $0x40] sm:$0xff]
    %v260 = vld [vmem:[#allocation4 + $0x48] sm:$0xff]
    %v261 = vld [vmem:[#allocation4 + $0x50] sm:$0xff]
    %v262 = vld [vmem:[#allocation4 + $0x58] sm:$0xff]
    %v263 = vld [vmem:[#allocation4 + $0x60] sm:$0xff]
    %v264 = vld [vmem:[#allocation4 + $0x68] sm:$0xff]
    %v265 = vld [vmem:[#allocation4 + $0x70] sm:$0xff]
    %v266 = vld [vmem:[#allocation4 + $0x78] sm:$0xff]
    %v267 = vld [vmem:[%s6] sm:$0x1]
    %v269 = vlaneseq
    %v270 = vshrl.u32 %v269, 7
    %v271 = vsub.s32 0, %v270
    %v272 = vrot.slane %v267, %v271
    %274 = vmatprep.subr.mxu0 0.0
    %275 = vmatpush1.msra.mxu0 %v251
    %276 = vmatprep.subr.mxu0 0.0
    %277 = vmatpush1.msra.mxu0 %v252
    %278 = vmatprep.subr.mxu0 0.0
    %279 = vmatpush1.msra.mxu0 %v253
    %280 = vmatprep.subr.mxu0 0.0
    %281 = vmatpush1.msra.mxu0 %v254
    %282 = vmatprep.subr.mxu0 0.0
    %283 = vmatpush1.msra.mxu0 %v255
    %284 = vmatprep.subr.mxu0 0.0
    %285 = vmatpush1.msra.mxu0 %v256
    %286 = vmatprep.subr.mxu0 0.0
    %287 = vmatpush1.msra.mxu0 %v257
    %288 = vmatprep.subr.mxu0 0.0
    %289 = vmatpush1.msra.mxu0 %v258
    %290 = vmatprep.subr.mxu0 0.0
    %291 = vmatpush1.msra.mxu0 %v259
    %292 = vmatprep.subr.mxu0 0.0
    %293 = vmatpush1.msra.mxu0 %v260
    %294 = vmatprep.subr.mxu0 0.0
    %295 = vmatpush1.msra.mxu0 %v261
    %296 = vmatprep.subr.mxu0 0.0
    %297 = vmatpush1.msra.mxu0 %v262
    %298 = vmatprep.subr.mxu0 0.0
    %299 = vmatpush1.msra.mxu0 %v263
    %300 = vmatprep.subr.mxu0 0.0
    %301 = vmatpush1.msra.mxu0 %v264
    %302 = vmatprep.subr.mxu0 0.0
    %303 = vmatpush1.msra.mxu0 %v265
    %304 = vmatprep.subr.mxu0 0.0
    %305 = vmatpush1.msra.mxu0 %v266
    %306 = vmatprep.subr.mxu0 0.0
    %307 = vmatpush1.msra.mxu0 0.0
    %308 = vmatprep.subr.mxu0 0.0
    %309 = vmatpush1.msra.mxu0 0.0
    %310 = vmatprep.subr.mxu0 0.0
    %311 = vmatpush1.msra.mxu0 0.0
    %312 = vmatprep.subr.mxu0 0.0
    %313 = vmatpush1.msra.mxu0 0.0
    %314 = vmatprep.subr.mxu0 0.0
    %315 = vmatpush1.msra.mxu0 0.0
    %316 = vmatprep.subr.mxu0 0.0
    %317 = vmatpush1.msra.mxu0 0.0
    %318 = vmatprep.subr.mxu0 0.0
    %319 = vmatpush1.msra.mxu0 0.0
    %320 = vmatprep.subr.mxu0 0.0
    %321 = vmatpush1.msra.mxu0 0.0
    %322 = vmatprep.subr.mxu0 0.0
    %323 = vmatpush1.msra.mxu0 0.0
    %324 = vmatprep.subr.mxu0 0.0
    %325 = vmatpush1.msra.mxu0 0.0
    %326 = vmatprep.subr.mxu0 0.0
    %327 = vmatpush1.msra.mxu0 0.0
    %328 = vmatprep.subr.mxu0 0.0
    %329 = vmatpush1.msra.mxu0 0.0
    %330 = vmatprep.subr.mxu0 0.0
    %331 = vmatpush1.msra.mxu0 0.0
    %332 = vmatprep.subr.mxu0 0.0
    %333 = vmatpush1.msra.mxu0 0.0
    %334 = vmatprep.subr.mxu0 0.0
    %335 = vmatpush1.msra.mxu0 0.0
    %336 = vmatprep.subr.mxu0 0.0
    %337 = vmatpush1.msra.mxu0 0.0
    %338 = vmatprep.mubr.f32.mxu0 0.0
    %339 = vmatmul.mubr.f32.gmra.mrb[0].mxu0 %v248
    %v340 = vpop.f32.mrb[0].mxu0
    %v341 = vadd.f32 %v272, %v340
    %v342 = vpop.f32.mrb[0].mxu0
    %343 = vdwg.mxu0
    %344 = vst [vmem:[#allocation6] sm:$0xff] %v341
    // Predicated region
    $region30: #{mlp_forward.1} parent=1 // pred_check
      _
    $region31: #{mlp_forward.1} parent=1 // pred_check_branch
      %346 = sbr.rel (0) target = $region33
    $region32: #{mlp_forward.1} parent=1 // pred_region
      %s348 = ssub.s32 128, 128
      %349 = vsyncadd [#allocation7], %s348
      %s351 = sshll.u32 [#allocation6], 4
      %s352 = int_to_ptr.vmem [resolvable:$true] %s351
      %354 = dma.vmem_to_hbm [thread:$0]  %s352, 128, %s7, [#allocation7]
    $region33: #{mlp_forward.1} parent=1 // pred_fallthru
      _
    // Predicated region
    $region34: #{mlp_forward.1} parent=1 // pred_check
      _
    $region35: #{mlp_forward.1} parent=1 // pred_check_branch
      %356 = sbr.rel (0) target = $region37
    $region36: #{mlp_forward.1} parent=1 // pred_region
      %357 = dma.done [#allocation7], 128
    $region37: #{mlp_forward.1} parent=1 // pred_fallthru
      _
    %358 = vsyncpa [#allocation7], 1
  %359 = vsyncmov [#allocation5]
  %s360 = vpop.sfrf %359
  %p361 = scmp.eq.s32.totalorder %s360, 0
  %p362 = pneg %p361
  %364 = shalt.err (%p362)
  %s365 = scalar_lea.sflag [#allocation5], 1
  %366 = vsyncmov %s365
  %s367 = vpop.sfrf %366
  %p368 = scmp.eq.s32.totalorder %s367, 0
  %p369 = pneg %p368
  %371 = shalt.err (%p369)
  %s372 = scalar_lea.sflag [#allocation5], 2
  %373 = vsyncmov %s372
  %s374 = vpop.sfrf %373
  %p375 = scmp.eq.s32.totalorder %s374, 0
  %p376 = pneg %p375
  %378 = shalt.err (%p376)

</llo_original>
